<compile_context>
chip_gen: v6e
topology: v6e:2x2x1
jax: 0.10.0
libtpu: 0.0.40
codegen_flags: <defaults>
</compile_context>

<pallas_src>
import functools

import numpy as np
import jax
import jax.numpy as jnp
from jax.experimental import pallas as pl
from jax.experimental.pallas import tpu as pltpu

LANES = 128
_LOG_2PI = float(np.log(2.0 * np.pi))


def _round_up(x, m):
    return (x + m - 1) // m * m


# -----------------------------------------------------------------------------
# Pallas kernel: mixture-of-gaussians log-prob, reduced over the latent dims
# and added to ldj.  Grid = (batch ["parallel"], row-tiles ["arbitrary"]).
# -----------------------------------------------------------------------------
def _mixture_logp_kernel(means_ref, a_ref, c_ref, ldj_ref, z_ref,
                         out_ref, acc_ref, *, n_gaussian, n_valid, has_pad):
    b = pl.program_id(0)            # batch index   ("parallel")
    j = pl.program_id(1)            # row-tile idx  ("arbitrary" reduction)
    n_tiles = pl.num_programs(1)

    @pl.when(j == 0)
    def _():
        acc_ref[...] = jnp.zeros_like(acc_ref)

    z = z_ref[0]                    # (TR, 128) f32, lane/sublane dense

    # logp_i(z) = c_i + a_i * (z - mean_i)^2 ; a_i, c_i precomputed on host.
    logps = [c_ref[i] + a_ref[i] * jnp.square(z - means_ref[i])
             for i in range(n_gaussian)]

    if n_gaussian == 1:
        lse = logps[0]
    else:
        # max-then-sum logsumexp: n_gaussian exps + 1 log, no serial chain.
        m = logps[0]
        for i in range(1, n_gaussian):
            m = jnp.maximum(m, logps[i])
        s = jnp.exp(logps[0] - m)
        for i in range(1, n_gaussian):
            s = s + jnp.exp(logps[i] - m)
        lse = m + jnp.log(s)

    if has_pad:
        tr, ln = z.shape
        row = jax.lax.broadcasted_iota(jnp.int32, (tr, ln), 0)
        lane = jax.lax.broadcasted_iota(jnp.int32, (tr, ln), 1)
        gidx = (j * tr + row) * ln + lane
        lse = jnp.where(gidx < n_valid, lse, 0.0)

    # Lane-dense VMEM accumulator; no output store, no cross-lane reduce here.
    acc_ref[...] += lse

    @pl.when(j == n_tiles - 1)
    def _():
        total = jnp.sum(acc_ref[...])
        res = (ldj_ref[b] + total
               - float(n_valid) * float(np.log(n_gaussian)))
        out_ref[...] = jnp.full(out_ref.shape, res, dtype=out_ref.dtype)


def mixture_logp_pallas(z_flat, ldj, means, log_stds):
    """z_flat: (B, N) f32, ldj: (B,) f32, means/log_stds: (G,) f32 -> (B,)."""
    B, N = z_flat.shape
    G = int(means.shape[0])

    # Lane-dense layout: (B, rows_pad, 128); rows-per-tile TR is a multiple of
    # 8 sublanes, capped at 2048 rows (1 MiB per buffer -> double-buffered
    # tiles + accumulator stay far below the v7x 64 MiB VMEM budget).
    rows = pl.cdiv(N, LANES)
    tr = min(2048, _round_up(rows, 8))
    rows_pad = _round_up(rows, tr)
    num_tiles = rows_pad // tr

    pad = rows_pad * LANES - N
    if pad:
        z_flat = jnp.pad(z_flat, ((0, 0), (0, pad)))
    z3 = z_flat.reshape(B, rows_pad, LANES)

    # Host-precomputed per-component scalars: logp_i = c_i + a_i*(z - mean_i)^2
    a_coef = (-0.5) * jnp.exp(-2.0 * log_stds)
    c_coef = (-0.5 * _LOG_2PI) - log_stds

    kernel = functools.partial(_mixture_logp_kernel, n_gaussian=G,
                               n_valid=N, has_pad=(pad != 0))

    out = pl.pallas_call(
        kernel,
        out_shape=jax.ShapeDtypeStruct((B, 8, LANES), jnp.float32),
        grid=(B, num_tiles),
        in_specs=[
            pl.BlockSpec(memory_space=pltpu.MemorySpace.SMEM),   # means
            pl.BlockSpec(memory_space=pltpu.MemorySpace.SMEM),   # a coefficients
            pl.BlockSpec(memory_space=pltpu.MemorySpace.SMEM),   # c coefficients
            pl.BlockSpec(memory_space=pltpu.MemorySpace.SMEM),   # ldj
            pl.BlockSpec((1, tr, LANES), lambda b, j: (b, j, 0)),  # z tile
        ],
        out_specs=pl.BlockSpec((1, 8, LANES), lambda b, j: (b, 0, 0)),
        scratch_shapes=[pltpu.VMEM((tr, LANES), jnp.float32)],
        compiler_params=pltpu.CompilerParams(
            dimension_semantics=("parallel", "arbitrary"),
            vmem_limit_bytes=32 * 1024 * 1024),
    )(means, a_coef, c_coef, ldj, z3)
    return out[:, 0, 0]


# -----------------------------------------------------------------------------
# Glue: squeeze (space-to-depth x2), matching is_squeeze=True of ConditionalFlow
# -----------------------------------------------------------------------------
def squeeze2x2(x):
    b, c, h, w = x.shape
    x = x.reshape(b, c, h // 2, 2, w // 2, 2)
    x = jnp.transpose(x, (0, 1, 3, 5, 2, 4))
    return x.reshape(b, c * 4, h // 2, w // 2)


def deg_flow_forward(z, ldj, u, means, log_stds):
    """DegFlow.forward with reverse=False, gaussian_id=None."""
    b = z.shape[0]
    # deg_net(z, ldj, u, reverse=False):
    z_sq = squeeze2x2(z)
    # TODO(synk): ConditionalFlow's 8 coupling steps unavailable -> identity, ldj unchanged.
    # The summed mixture log-prob is permutation-invariant over elements, so
    # feed the original contiguous z (avoids a layout copy of transposed z_sq).
    z_flat = z.reshape(b, -1).astype(jnp.float32)

    ldj_out = mixture_logp_pallas(
        z_flat,
        ldj.reshape(b).astype(jnp.float32),
        means.astype(jnp.float32),
        log_stds.astype(jnp.float32),
    )
    return z_sq, ldj_out


# Pure-JAX reference for correctness checking (computed on the squeezed z,
# exactly as the PyTorch module does).
def _reference(z, ldj, means, log_stds):
    b = z.shape[0]
    z_sq = squeeze2x2(z)
    zf = z_sq.reshape(b, 1, -1).astype(jnp.float32)           # (B, 1, N)
    mu = means.reshape(1, -1, 1)
    ls = log_stds.reshape(1, -1, 1)
    logps = (-0.5 * np.log(2.0 * np.pi) - ls
             - 0.5 * (zf - mu) ** 2 * jnp.exp(-2.0 * ls))      # (B, G, N)
    mix = jax.nn.logsumexp(logps, axis=1) - np.log(means.shape[0])
    return ldj + jnp.sum(mix, axis=-1)


if __name__ == "__main__":
    # Module config (small, consistent with the forward).
    in_channels, cond_channels, n_gaussian = 4, 3, 3
    B, H, W = 2, 16, 16

    key = jax.random.PRNGKey(0)
    k_means, k_z, k_u, k_ldj = jax.random.split(key, 4)

    # Parameters (deterministic init, as in __init__: randn means, zero log_stds).
    means = jax.random.normal(k_means, (n_gaussian,), dtype=jnp.float32)
    log_stds = jnp.zeros((n_gaussian,), dtype=jnp.float32)

    # Inputs.
    z = jax.random.normal(k_z, (B, in_channels, H, W), dtype=jnp.float32)
    u = jax.random.normal(k_u, (B, cond_channels, H, W), dtype=jnp.float32)
    ldj = jax.random.normal(k_ldj, (B,), dtype=jnp.float32)

    z_out, ldj_out = deg_flow_forward(z, ldj, u, means, log_stds)
    jax.block_until_ready((z_out, ldj_out))

    ldj_ref = _reference(z, ldj, means, log_stds)
    np.testing.assert_allclose(np.asarray(ldj_out), np.asarray(ldj_ref),
                               rtol=1e-5, atol=1e-4)
    assert z_out.shape == (B, in_channels * 4, H // 2, W // 2)

    print("KERNEL_OK")
</pallas_src>

<mosaic_0001>
module attributes {stable_mosaic.version = 11 : i64} {
  func.func @_mixture_logp_kernel(%arg0: i32, %arg1: i32, %arg2: memref<3xf32, #tpu.memory_space<smem>>, %arg3: memref<3xf32, #tpu.memory_space<smem>>, %arg4: memref<3xf32, #tpu.memory_space<smem>>, %arg5: memref<2xf32, #tpu.memory_space<smem>>, %arg6: memref<1x8x128xf32, #tpu.memory_space<vmem>>, %arg7: memref<1x8x128xf32, #tpu.memory_space<vmem>>, %arg8: memref<8x128xf32, #tpu.memory_space<vmem>>) attributes {dimension_semantics = [#tpu.dimension_semantics<parallel>, #tpu.dimension_semantics<arbitrary>], iteration_bounds = array<i64: 2, 1>, scalar_prefetch = 0 : i64, scratch_operands = 1 : i64, tpu.core_type = #tpu.core_type<tc>, window_params = [{transform_indices = @transform_0, window_bounds = array<i64: 3>}, {transform_indices = @transform_1, window_bounds = array<i64: 3>}, {transform_indices = @transform_2, window_bounds = array<i64: 3>}, {transform_indices = @transform_3, window_bounds = array<i64: 2>}, {transform_indices = @transform_4, window_bounds = array<i64: 1, 8, 128>}, {transform_indices = @transform_5, window_bounds = array<i64: 1, 8, 128>}]} {
    %c0_i32 = arith.constant 0 : i32
    %0 = arith.cmpi eq, %arg1, %c0_i32 : i32
    %1 = arith.extui %0 : i1 to i32
    %c0_i32_0 = arith.constant 0 : i32
    %2 = arith.cmpi ne, %1, %c0_i32_0 : i32
    scf.if %2 {
      %cst = arith.constant 0.000000e+00 : f32
      %53 = vector.broadcast %cst : f32 to vector<8x128xf32>
      %c0_16 = arith.constant 0 : index
      %c0_17 = arith.constant 0 : index
      %54 = vector.load %arg8[%c0_16, %c0_17] : memref<8x128xf32, #tpu.memory_space<vmem>>, vector<8x128xf32>
      tpu.vector_store %arg8[%c0_16, %c0_17], %53 {strides = array<i32>} : memref<8x128xf32, #tpu.memory_space<vmem>>, vector<8x128xf32>,
    } else {
    }
    %c0 = arith.constant 0 : index
    %c0_1 = arith.constant 0 : index
    %c0_2 = arith.constant 0 : index
    %3 = vector.load %arg6[%c0, %c0_1, %c0_2] : memref<1x8x128xf32, #tpu.memory_space<vmem>>, vector<1x8x128xf32>
    %4 = vector.shape_cast %3 : vector<1x8x128xf32> to vector<8x128xf32>
    %c0_3 = arith.constant 0 : index
    %5 = memref.load %arg4[%c0_3] : memref<3xf32, #tpu.memory_space<smem>>
    %c0_4 = arith.constant 0 : index
    %6 = memref.load %arg3[%c0_4] : memref<3xf32, #tpu.memory_space<smem>>
    %c0_5 = arith.constant 0 : index
    %7 = memref.load %arg2[%c0_5] : memref<3xf32, #tpu.memory_space<smem>>
    %8 = vector.broadcast %7 : f32 to vector<8x128xf32>
    %9 = arith.subf %4, %8 : vector<8x128xf32>
    %10 = arith.mulf %9, %9 : vector<8x128xf32>
    %11 = vector.broadcast %6 : f32 to vector<8x128xf32>
    %12 = arith.mulf %11, %10 : vector<8x128xf32>
    %13 = vector.broadcast %5 : f32 to vector<8x128xf32>
    %14 = arith.addf %13, %12 : vector<8x128xf32>
    %c1 = arith.constant 1 : index
    %15 = memref.load %arg4[%c1] : memref<3xf32, #tpu.memory_space<smem>>
    %c1_6 = arith.constant 1 : index
    %16 = memref.load %arg3[%c1_6] : memref<3xf32, #tpu.memory_space<smem>>
    %c1_7 = arith.constant 1 : index
    %17 = memref.load %arg2[%c1_7] : memref<3xf32, #tpu.memory_space<smem>>
    %18 = vector.broadcast %17 : f32 to vector<8x128xf32>
    %19 = arith.subf %4, %18 : vector<8x128xf32>
    %20 = arith.mulf %19, %19 : vector<8x128xf32>
    %21 = vector.broadcast %16 : f32 to vector<8x128xf32>
    %22 = arith.mulf %21, %20 : vector<8x128xf32>
    %23 = vector.broadcast %15 : f32 to vector<8x128xf32>
    %24 = arith.addf %23, %22 : vector<8x128xf32>
    %c2 = arith.constant 2 : index
    %25 = memref.load %arg4[%c2] : memref<3xf32, #tpu.memory_space<smem>>
    %c2_8 = arith.constant 2 : index
    %26 = memref.load %arg3[%c2_8] : memref<3xf32, #tpu.memory_space<smem>>
    %c2_9 = arith.constant 2 : index
    %27 = memref.load %arg2[%c2_9] : memref<3xf32, #tpu.memory_space<smem>>
    %28 = vector.broadcast %27 : f32 to vector<8x128xf32>
    %29 = arith.subf %4, %28 : vector<8x128xf32>
    %30 = arith.mulf %29, %29 : vector<8x128xf32>
    %31 = vector.broadcast %26 : f32 to vector<8x128xf32>
    %32 = arith.mulf %31, %30 : vector<8x128xf32>
    %33 = vector.broadcast %25 : f32 to vector<8x128xf32>
    %34 = arith.addf %33, %32 : vector<8x128xf32>
    %35 = arith.maximumf %14, %24 : vector<8x128xf32>
    %36 = arith.maximumf %35, %34 : vector<8x128xf32>
    %37 = arith.subf %14, %36 : vector<8x128xf32>
    %38 = math.exp %37 : vector<8x128xf32>
    %39 = arith.subf %24, %36 : vector<8x128xf32>
    %40 = math.exp %39 : vector<8x128xf32>
    %41 = arith.addf %38, %40 : vector<8x128xf32>
    %42 = arith.subf %34, %36 : vector<8x128xf32>
    %43 = math.exp %42 : vector<8x128xf32>
    %44 = arith.addf %41, %43 : vector<8x128xf32>
    %45 = math.log %44 : vector<8x128xf32>
    %46 = arith.addf %36, %45 : vector<8x128xf32>
    %c0_10 = arith.constant 0 : index
    %c0_11 = arith.constant 0 : index
    %47 = vector.load %arg8[%c0_10, %c0_11] : memref<8x128xf32, #tpu.memory_space<vmem>>, vector<8x128xf32>
    %48 = arith.addf %47, %46 : vector<8x128xf32>
    %c0_12 = arith.constant 0 : index
    %c0_13 = arith.constant 0 : index
    %49 = vector.load %arg8[%c0_12, %c0_13] : memref<8x128xf32, #tpu.memory_space<vmem>>, vector<8x128xf32>
    tpu.vector_store %arg8[%c0_12, %c0_13], %48 {strides = array<i32>} : memref<8x128xf32, #tpu.memory_space<vmem>>, vector<8x128xf32>,
    %c0_i32_14 = arith.constant 0 : i32
    %50 = arith.cmpi eq, %arg1, %c0_i32_14 : i32
    %51 = arith.extui %50 : i1 to i32
    %c0_i32_15 = arith.constant 0 : i32
    %52 = arith.cmpi ne, %51, %c0_i32_15 : i32
    scf.if %52 {
      %c0_16 = arith.constant 0 : index
      %c0_17 = arith.constant 0 : index
      %53 = vector.load %arg8[%c0_16, %c0_17] : memref<8x128xf32, #tpu.memory_space<vmem>>, vector<8x128xf32>
      %54 = vector.shape_cast %53 : vector<8x128xf32> to vector<1x8x128xf32>
      %cst = arith.constant dense<0.000000e+00> : vector<1xf32>
      %55 = vector.multi_reduction <add>, %54, %cst [1, 2] : vector<1x8x128xf32> to vector<1xf32>
      %56 = vector.shape_cast %55 : vector<1xf32> to vector<1x1x1xf32>
      %57 = vector.extract %56[0, 0, 0] : f32 from vector<1x1x1xf32>
      %58 = arith.index_cast %arg0 : i32 to index
      %59 = memref.load %arg5[%58] : memref<2xf32, #tpu.memory_space<smem>>
      %60 = arith.addf %59, %57 : f32
      %cst_18 = arith.constant 1124.979 : f32
      %61 = arith.subf %60, %cst_18 : f32
      %62 = vector.broadcast %61 : f32 to vector<1x8x128xf32>
      %c0_19 = arith.constant 0 : index
      %c0_20 = arith.constant 0 : index
      %c0_21 = arith.constant 0 : index
      %63 = vector.load %arg7[%c0_19, %c0_20, %c0_21] : memref<1x8x128xf32, #tpu.memory_space<vmem>>, vector<1x8x128xf32>
      tpu.vector_store %arg7[%c0_19, %c0_20, %c0_21], %62 {strides = array<i32>} : memref<1x8x128xf32, #tpu.memory_space<vmem>>, vector<1x8x128xf32>,
    } else {
    }
    return
  }
  func.func @transform_0(%arg0: i32, %arg1: i32) -> i32 {
    %c0_i32 = arith.constant 0 : i32
    %c0_i32_0 = arith.constant 0 : i32
    return %c0_i32 : i32
  }
  func.func @transform_1(%arg0: i32, %arg1: i32) -> i32 {
    %c0_i32 = arith.constant 0 : i32
    %c0_i32_0 = arith.constant 0 : i32
    return %c0_i32 : i32
  }
  func.func @transform_2(%arg0: i32, %arg1: i32) -> i32 {
    %c0_i32 = arith.constant 0 : i32
    %c0_i32_0 = arith.constant 0 : i32
    return %c0_i32 : i32
  }
  func.func @transform_3(%arg0: i32, %arg1: i32) -> i32 {
    %c0_i32 = arith.constant 0 : i32
    %c0_i32_0 = arith.constant 0 : i32
    return %c0_i32 : i32
  }
  func.func @transform_4(%arg0: i32, %arg1: i32) -> (i32, i32, i32) {
    %c0_i32 = arith.constant 0 : i32
    %c0_i32_0 = arith.constant 0 : i32
    return %arg0, %arg1, %c0_i32 : i32, i32, i32
  }
  func.func @transform_5(%arg0: i32, %arg1: i32) -> (i32, i32, i32) {
    %c0_i32 = arith.constant 0 : i32
    %c0_i32_0 = arith.constant 0 : i32
    %c0_i32_1 = arith.constant 0 : i32
    return %arg0, %c0_i32, %c0_i32_0 : i32, i32, i32
  }
}

</mosaic_0001>

<llo_original>
// kernel: tpu_custom_call.1
$region0: #{tpu_custom_call.1}
  #allocation0 [shape = 'u32[]', space=smem, size = 0x4, offset = 0x4, fixed_abs, tag = 'smem constant byte address 0x4 - core index']
  #allocation1 [shape = 'u32[144,128]{1,0:T(1,128)}', space=vmem, size = 0x12000, scoped, tag = 'internal scratch']
  #allocation2 [shape = 'f32[8,128]{1,0:T(8,128)}', space=vmem, size = 0x1000, scoped, tag = 'scratch operand']
  %s0 = inlined_call_operand.hbm [shape: f32[3], index: 0, kind: input, shape index: {}]
  %s1 = inlined_call_operand.vmem [shape: f32[3], index: 1, kind: input, shape index: {}]
  %s2 = inlined_call_operand.vmem [shape: f32[3], index: 2, kind: input, shape index: {}]
  %s3 = inlined_call_operand.vmem [shape: f32[2], index: 3, kind: input, shape index: {}]
  %s4 = inlined_call_operand.hbm [shape: f32[2,8,128], index: 4, kind: input, shape index: {}]
  %s5 = inlined_call_operand.hbm [shape: f32[2,8,128], index: 5, kind: output, shape index: {}]
  %s6 = sld [smem:[#allocation0]]
  $region81: #{tpu_custom_call.1} parent=0
    _
  %s8 = ssub.s32 1, %s6
  %s9 = scalar_select 0, %s8, %s6
  $region1: #{tpu_custom_call.1} parent=0
    #allocation3 [shape = 'u8[512]{0}', space=smem, size = 0x200, scoped, tag = 'input window, operand 0, single buffered']
    #allocation4 [shape = 's32[2]{0}', space=sflag, size = 0x8, scoped, tag = 'scoped memory for tpu_custom_call.1']
    #allocation5 [shape = 's32[2]{0}', space=sflag, size = 0x8, scoped, tag = 'scoped memory for tpu_custom_call.1']
    #allocation6 [shape = 's32[2]{0}', space=sflag, size = 0x8, scoped, tag = 'scoped memory for tpu_custom_call.1']
    #allocation7 [shape = 's32[2]{0}', space=sflag, size = 0x8, scoped, tag = 'scoped memory for tpu_custom_call.1']
    #allocation8 [shape = 'u8[512]{0}', space=smem, size = 0x200, scoped, tag = 'input window, operand 1, single buffered']
    #allocation9 [shape = 'u8[512]{0}', space=smem, size = 0x200, scoped, tag = 'input window, operand 2, single buffered']
    #allocation10 [shape = 's32[1]{0}', space=sflag, size = 0x4, scoped, tag = 'scoped memory for tpu_custom_call.1']
    #allocation11 [shape = 'u8[512]{0}', space=smem, size = 0x200, scoped, tag = 'input window, operand 3, single buffered']
    #allocation12 [shape = 'u8[8192]{0}', space=vmem, size = 0x2000, scoped, tag = 'input window, operand 4']
    #allocation13 [shape = 'u8[8192]{0}', space=vmem, size = 0x2000, scoped, tag = 'output window, operand 0']
    %10 = vsyncpa [#allocation6], 0
    %11 = vsyncpa [#allocation7], 0
    %12 = vsyncpa [#allocation10], 0
    %13 = vsyncpa [#allocation4], 0
    %s14 = scalar_lea.sflag [#allocation4], 1
    %15 = vsyncpa %s14, 0
    %16 = vsyncpa [#allocation5], 0
    %s17 = scalar_lea.sflag [#allocation5], 1
    %18 = vsyncpa %s17, 0
    loop: start=0, step=1, limit=4
    $region2: #{tpu_custom_call.1} parent=1 // loop_pre_header
      _
    $region3: #{tpu_custom_call.1} parent=1 // loop_header
      %s20 = sphi 0, %s24
      %p21 = scmp.ge.s32.totalorder %s20, 4
      %s27 = sphi 0, %s39
      %s28 = sphi 0, %s35
      %s29 = sphi 0, %s27
      %s30 = sphi 0, %s28
      %s31 = sphi 0, %s29
      %s32 = sphi 0, %s30
      %s40 = sphi 0, %s40
      %s42 = sphi 0, %s40
      %s43 = sphi 0, %s42
      %s57 = sphi 0, %s43
      %s61 = sphi 0, %s61
      %s63 = sphi 0, %s61
      %s64 = sphi 0, %s63
      %s78 = sphi 0, %s64
      %s82 = sphi 0, %s82
      %s84 = sphi 0, %s82
      %s85 = sphi 0, %s84
      %s99 = sphi 0, %s85
      %s103 = sphi 0, %s103
      %s105 = sphi 0, %s103
      %s106 = sphi 0, %s105
      %s120 = sphi 0, %s106
      %s128 = sphi 0, %s130
      %s131 = sphi 0, %s128
      %s132 = sphi 0, %s131
      %s148 = sphi 0, %s132
      %s154 = sphi 0, %s156
      %s157 = sphi 0, %s154
      %s158 = sphi 0, %s157
      %s174 = sphi 0, %s158
    $region4: #{tpu_custom_call.1} parent=1 // loop_header_branch
      %23 = sbr.rel (%p21) target = $region8
    $region5: #{tpu_custom_call.1} parent=1 // loop_body
      %s25 = ssub.s32 %s20, 1
      %s26 = ssub.s32 %s20, 2
      %s33 = sadd.s32 1, %s28
      %p34 = scmp.ge.s32.totalorder %s33, 1
      %s35 = scalar_select %p34, 0, %s33
      %s36 = sadd.s32 1, %s27
      %s37 = scalar_select %p34, %s36, %s27
      %p38 = scmp.ge.s32.totalorder %s37, 2
      %s39 = scalar_select %p38, 0, %s37
      %s41 = sadd.s32 %s40, 1
      %p44 = scmp.eq.s32.totalorder %s20, 1
      %p45 = scmp.ne.s32.totalorder %s40, %s42
      %p46 = scmp.eq.s32.totalorder %s20, 0
      %p47 = por %p45, %p46
      %p48 = scmp.ne.s32.totalorder %s40, %s42
      %p49 = scmp.eq.s32.totalorder %s25, 1
      %p50 = por %p48, %p49
      %p51 = scmp.ne.s32.totalorder %s42, %s43
      %p52 = scmp.eq.s32.totalorder %s25, 0
      %p53 = por %p51, %p52
      %p54 = scmp.ne.s32.totalorder %s42, %s43
      %p55 = scmp.eq.s32.totalorder %s26, 1
      %p56 = por %p54, %p55
      %p58 = scmp.ne.s32.totalorder %s43, %s57
      %p59 = scmp.eq.s32.totalorder %s26, 0
      %p60 = por %p58, %p59
      %s62 = sadd.s32 %s61, 1
      %p65 = scmp.eq.s32.totalorder %s20, 1
      %p66 = scmp.ne.s32.totalorder %s61, %s63
      %p67 = scmp.eq.s32.totalorder %s20, 0
      %p68 = por %p66, %p67
      %p69 = scmp.ne.s32.totalorder %s61, %s63
      %p70 = scmp.eq.s32.totalorder %s25, 1
      %p71 = por %p69, %p70
      %p72 = scmp.ne.s32.totalorder %s63, %s64
      %p73 = scmp.eq.s32.totalorder %s25, 0
      %p74 = por %p72, %p73
      %p75 = scmp.ne.s32.totalorder %s63, %s64
      %p76 = scmp.eq.s32.totalorder %s26, 1
      %p77 = por %p75, %p76
      %p79 = scmp.ne.s32.totalorder %s64, %s78
      %p80 = scmp.eq.s32.totalorder %s26, 0
      %p81 = por %p79, %p80
      %s83 = sadd.s32 %s82, 1
      %p86 = scmp.eq.s32.totalorder %s20, 1
      %p87 = scmp.ne.s32.totalorder %s82, %s84
      %p88 = scmp.eq.s32.totalorder %s20, 0
      %p89 = por %p87, %p88
      %p90 = scmp.ne.s32.totalorder %s82, %s84
      %p91 = scmp.eq.s32.totalorder %s25, 1
      %p92 = por %p90, %p91
      %p93 = scmp.ne.s32.totalorder %s84, %s85
      %p94 = scmp.eq.s32.totalorder %s25, 0
      %p95 = por %p93, %p94
      %p96 = scmp.ne.s32.totalorder %s84, %s85
      %p97 = scmp.eq.s32.totalorder %s26, 1
      %p98 = por %p96, %p97
      %p100 = scmp.ne.s32.totalorder %s85, %s99
      %p101 = scmp.eq.s32.totalorder %s26, 0
      %p102 = por %p100, %p101
      %s104 = sadd.s32 %s103, 1
      %p107 = scmp.eq.s32.totalorder %s20, 1
      %p108 = scmp.ne.s32.totalorder %s103, %s105
      %p109 = scmp.eq.s32.totalorder %s20, 0
      %p110 = por %p108, %p109
      %p111 = scmp.ne.s32.totalorder %s103, %s105
      %p112 = scmp.eq.s32.totalorder %s25, 1
      %p113 = por %p111, %p112
      %p114 = scmp.ne.s32.totalorder %s105, %s106
      %p115 = scmp.eq.s32.totalorder %s25, 0
      %p116 = por %p114, %p115
      %p117 = scmp.ne.s32.totalorder %s105, %s106
      %p118 = scmp.eq.s32.totalorder %s26, 1
      %p119 = por %p117, %p118
      %p121 = scmp.ne.s32.totalorder %s106, %s120
      %p122 = scmp.eq.s32.totalorder %s26, 0
      %p123 = por %p121, %p122
      %s124 = ssub.s32 %s27, %s39
      %s125 = ssub.s32 %s28, %s35
      %s126 = sor.u32 %s124, %s125
      %p127 = scmp.eq.s32.totalorder %s126, 0
      %s129 = sadd.s32 %s128, 1
      %s130 = scalar_select %p127, %s128, %s129
      %p133 = pneg %p127
      %p134 = scmp.eq.s32.totalorder %s20, 1
      %p135 = por %p133, %p134
      %p136 = scmp.ne.s32.totalorder %s128, %s131
      %p137 = scmp.eq.s32.totalorder %s20, 0
      %p138 = por %p136, %p137
      %p139 = scmp.ne.s32.totalorder %s128, %s131
      %p140 = scmp.eq.s32.totalorder %s25, 1
      %p141 = por %p139, %p140
      %p142 = scmp.ne.s32.totalorder %s131, %s132
      %p143 = scmp.eq.s32.totalorder %s25, 0
      %p144 = por %p142, %p143
      %p145 = scmp.ne.s32.totalorder %s131, %s132
      %p146 = scmp.eq.s32.totalorder %s26, 1
      %p147 = por %p145, %p146
      %p149 = scmp.ne.s32.totalorder %s132, %s148
      %p150 = scmp.eq.s32.totalorder %s26, 0
      %p151 = por %p149, %p150
      %s152 = ssub.s32 %s27, %s39
      %p153 = scmp.eq.s32.totalorder %s152, 0
      %s155 = sadd.s32 %s154, 1
      %s156 = scalar_select %p153, %s154, %s155
      %p159 = pneg %p153
      %p160 = scmp.eq.s32.totalorder %s20, 1
      %p161 = por %p159, %p160
      %p162 = scmp.ne.s32.totalorder %s154, %s157
      %p163 = scmp.eq.s32.totalorder %s20, 0
      %p164 = por %p162, %p163
      %p165 = scmp.ne.s32.totalorder %s154, %s157
      %p166 = scmp.eq.s32.totalorder %s25, 1
      %p167 = por %p165, %p166
      %p168 = scmp.ne.s32.totalorder %s157, %s158
      %p169 = scmp.eq.s32.totalorder %s25, 0
      %p170 = por %p168, %p169
      %p171 = scmp.ne.s32.totalorder %s157, %s158
      %p172 = scmp.eq.s32.totalorder %s26, 1
      %p173 = por %p171, %p172
      %p175 = scmp.ne.s32.totalorder %s158, %s174
      %p176 = scmp.eq.s32.totalorder %s26, 0
      %p177 = por %p175, %p176
      %p178 = scmp.le.s32.totalorder 1, %s20
      %p179 = scmp.lt.s32.totalorder %s20, 3
      %p180 = pnand %p178, %p179
      %p181 = pneg %p180
      // Predicated region
      $region9: #{tpu_custom_call.1} parent=5 // pred_check
        _
      $region10: #{tpu_custom_call.1} parent=5 // pred_check_branch
        %183 = sbr.rel (%p180) target = $region12
      $region11: #{tpu_custom_call.1} parent=5 // pred_region
        %s184 = ssub.s32 %s20, 1
        // Predicated region
        $region13: #{tpu_custom_call.1} parent=11 // pred_check
          %p185 = pneg %p53
        $region14: #{tpu_custom_call.1} parent=11 // pred_check_branch
          %187 = sbr.rel (%p185) target = $region16
        $region15: #{tpu_custom_call.1} parent=11 // pred_region
          %s189 = ssub.s32 16, 16
          %190 = vsyncadd [#allocation6], %s189
          %193 = dma.hbm_to_smem %s0, 16, [#allocation3], [#allocation6]
        $region16: #{tpu_custom_call.1} parent=11 // pred_fallthru
          _
        // Predicated region
        $region17: #{tpu_custom_call.1} parent=11 // pred_check
          %p194 = pneg %p74
        $region18: #{tpu_custom_call.1} parent=11 // pred_check_branch
          %196 = sbr.rel (%p194) target = $region20
        $region19: #{tpu_custom_call.1} parent=11 // pred_region
          %s198 = ssub.s32 16, 16
          %199 = vsyncadd [#allocation7], %s198
          %s201 = sshll.u32 %s1, 4
          %s202 = int_to_ptr.vmem [resolvable:$true] %s201
          %204 = dma.vmem_to_smem %s202, 16, [#allocation8], [#allocation7]
        $region20: #{tpu_custom_call.1} parent=11 // pred_fallthru
          _
        // Predicated region
        $region21: #{tpu_custom_call.1} parent=11 // pred_check
          %p205 = pneg %p95
        $region22: #{tpu_custom_call.1} parent=11 // pred_check_branch
          %207 = sbr.rel (%p205) target = $region24
        $region23: #{tpu_custom_call.1} parent=11 // pred_region
          %s209 = ssub.s32 16, 16
          %210 = vsyncadd [#allocation10], %s209
          %s212 = sshll.u32 %s2, 4
          %s213 = int_to_ptr.vmem [resolvable:$true] %s212
          %215 = dma.vmem_to_smem %s213, 16, [#allocation9], [#allocation10]
        $region24: #{tpu_custom_call.1} parent=11 // pred_fallthru
          _
        // Predicated region
        $region25: #{tpu_custom_call.1} parent=11 // pred_check
          %p216 = pneg %p116
        $region26: #{tpu_custom_call.1} parent=11 // pred_check_branch
          %218 = sbr.rel (%p216) target = $region28
        $region27: #{tpu_custom_call.1} parent=11 // pred_region
          %s220 = ssub.s32 16, 16
          %221 = vsyncadd [#allocation10], %s220
          %s223 = sshll.u32 %s3, 4
          %s224 = int_to_ptr.vmem [resolvable:$true] %s223
          %226 = dma.vmem_to_smem %s224, 16, [#allocation11], [#allocation10]
        $region28: #{tpu_custom_call.1} parent=11 // pred_fallthru
          _
      $region12: #{tpu_custom_call.1} parent=5 // pred_fallthru
        _
      %p227 = scmp.lt.s32.totalorder %s20, 2
      // Predicated region
      $region29: #{tpu_custom_call.1} parent=5 // pred_check
        %p228 = pneg %p227
      $region30: #{tpu_custom_call.1} parent=5 // pred_check_branch
        %230 = sbr.rel (%p228) target = $region32
      $region31: #{tpu_custom_call.1} parent=5 // pred_region
        // Predicated region
        $region33: #{tpu_custom_call.1} parent=31 // pred_check
          %p231 = pneg %p138
        $region34: #{tpu_custom_call.1} parent=31 // pred_check_branch
          %233 = sbr.rel (%p231) target = $region36
        $region35: #{tpu_custom_call.1} parent=31 // pred_region
          %s234 = sand.u32 %s128, 1
          %s235 = scalar_lea.sflag [#allocation4], %s234
          %s236 = sand.u32 %s128, 1
          %s237 = smul.addr %s236, 8
          %s238 = scalar_lea.vmem [#allocation12], %s237
          %s240 = ssub.s32 128, 128
          %241 = vsyncadd %s235, %s240
          %s242 = sadd.s32 %s28, %s27
          %s243 = smul.addr %s242, 128
          %s244 = scalar_lea.hbm %s4, %s243
          %s246 = sshll.u32 %s238, 4
          %s247 = int_to_ptr.vmem [resolvable:$true] %s246
          %249 = dma.hbm_to_vmem [thread:$0]  %s244, 128, %s247, %s235
        $region36: #{tpu_custom_call.1} parent=31 // pred_fallthru
          _
      $region32: #{tpu_custom_call.1} parent=5 // pred_fallthru
        _
      %p250 = scmp.le.s32.totalorder 1, %s20
      %p251 = scmp.lt.s32.totalorder %s20, 3
      %p252 = pnand %p250, %p251
      %p253 = pneg %p252
      // Predicated region
      $region37: #{tpu_custom_call.1} parent=5 // pred_check
        _
      $region38: #{tpu_custom_call.1} parent=5 // pred_check_branch
        %255 = sbr.rel (%p252) target = $region40
      $region39: #{tpu_custom_call.1} parent=5 // pred_region
        %s256 = ssub.s32 %s20, 1
        // Predicated region
        $region41: #{tpu_custom_call.1} parent=39 // pred_check
          %p257 = pneg %p53
        $region42: #{tpu_custom_call.1} parent=39 // pred_check_branch
          %259 = sbr.rel (%p257) target = $region44
        $region43: #{tpu_custom_call.1} parent=39 // pred_region
          %260 = dma.done [#allocation6], 16
        $region44: #{tpu_custom_call.1} parent=39 // pred_fallthru
          _
        // Predicated region
        $region45: #{tpu_custom_call.1} parent=39 // pred_check
          %p261 = pneg %p74
        $region46: #{tpu_custom_call.1} parent=39 // pred_check_branch
          %263 = sbr.rel (%p261) target = $region48
        $region47: #{tpu_custom_call.1} parent=39 // pred_region
          %264 = dma.done [#allocation7], 16
        $region48: #{tpu_custom_call.1} parent=39 // pred_fallthru
          _
        // Predicated region
        $region49: #{tpu_custom_call.1} parent=39 // pred_check
          %p265 = pneg %p95
        $region50: #{tpu_custom_call.1} parent=39 // pred_check_branch
          %267 = sbr.rel (%p265) target = $region52
        $region51: #{tpu_custom_call.1} parent=39 // pred_region
          %268 = dma.done [#allocation10], 16
        $region52: #{tpu_custom_call.1} parent=39 // pred_fallthru
          _
        // Predicated region
        $region53: #{tpu_custom_call.1} parent=39 // pred_check
          %p269 = pneg %p116
        $region54: #{tpu_custom_call.1} parent=39 // pred_check_branch
          %271 = sbr.rel (%p269) target = $region56
        $region55: #{tpu_custom_call.1} parent=39 // pred_region
          %272 = dma.done [#allocation10], 16
        $region56: #{tpu_custom_call.1} parent=39 // pred_fallthru
          _
        %s273 = sand.u32 %s131, 1
        %s274 = scalar_lea.sflag [#allocation4], %s273
        %s275 = sand.u32 %s131, 1
        %s276 = smul.addr %s275, 8
        %s277 = scalar_lea.vmem [#allocation12], %s276
        // Predicated region
        $region57: #{tpu_custom_call.1} parent=39 // pred_check
          %p278 = pneg %p144
        $region58: #{tpu_custom_call.1} parent=39 // pred_check_branch
          %280 = sbr.rel (%p278) target = $region60
        $region59: #{tpu_custom_call.1} parent=39 // pred_region
          %281 = dma.done %s274, 128
        $region60: #{tpu_custom_call.1} parent=39 // pred_fallthru
          _
        %282 = sfence
        %p283 = pneg %p53
        %p284 = pneg %p50
        %p285 = pneg %p74
        %p286 = pneg %p71
        %p287 = pneg %p95
        %p288 = pneg %p92
        %p289 = pneg %p116
        %p290 = pneg %p113
        %s291 = sand.u32 %s131, 1
        %s292 = scalar_lea.sflag [#allocation4], %s291
        %s293 = sand.u32 %s131, 1
        %s294 = smul.addr %s293, 8
        %s295 = scalar_lea.vmem [#allocation12], %s294
        %p296 = pneg %p144
        %p297 = pneg %p141
        %p298 = pneg %p170
        %p299 = pneg %p167
        %s300 = sand.u32 %s157, 1
        %s301 = scalar_lea.sflag [#allocation5], %s300
        %s302 = sand.u32 %s157, 1
        %s303 = smul.addr %s302, 8
        %s304 = scalar_lea.vmem [#allocation13], %s303
        %p305 = scmp.eq.s32.totalorder %s30, 0
        // Predicated region
        $region61: #{tpu_custom_call.1} parent=39 // pred_check
          %p306 = pneg %p305
        $region62: #{tpu_custom_call.1} parent=39 // pred_check_branch
          %308 = sbr.rel (%p306) target = $region64
        $region63: #{tpu_custom_call.1} parent=39 // pred_region
          %309 = vst [vmem:[#allocation2] sm:$0xff] 0.0
        $region64: #{tpu_custom_call.1} parent=39 // pred_fallthru
          _
        %v310 = vld [vmem:[%s277] sm:$0xff]
        %s311 = sld [smem:[#allocation9]]
        %s312 = sld [smem:[#allocation8]]
        %s313 = sld [smem:[#allocation3]]
        %v314 = vstv %s313
        %v315 = vsub.f32 %v310, %v314
        %v316 = vmul.f32 %v315, %v315
        %v317 = vstv %s312
        %v318 = vmul.f32 %v317, %v316
        %v319 = vstv %s311
        %v320 = vadd.f32 %v319, %v318
        %s321 = sld [smem:[#allocation9 + $0x1]]
        %s322 = sld [smem:[#allocation8 + $0x1]]
        %s323 = sld [smem:[#allocation3 + $0x1]]
        %v324 = vstv %s323
        %v325 = vsub.f32 %v310, %v324
        %v326 = vmul.f32 %v325, %v325
        %v327 = vstv %s322
        %v328 = vmul.f32 %v327, %v326
        %v329 = vstv %s321
        %v330 = vadd.f32 %v329, %v328
        %s331 = sld [smem:[#allocation9 + $0x2]]
        %s332 = sld [smem:[#allocation8 + $0x2]]
        %s333 = sld [smem:[#allocation3 + $0x2]]
        %v334 = vstv %s333
        %v335 = vsub.f32 %v310, %v334
        %v336 = vmul.f32 %v335, %v335
        %v337 = vstv %s332
        %v338 = vmul.f32 %v337, %v336
        %v339 = vstv %s331
        %v340 = vadd.f32 %v339, %v338
        %v341 = vmax.f32 %v320, %v330
        %v342 = vmax.f32 %v341, %v340
        %v343 = vsub.f32 %v320, %v342
        %v344 = vmul.f32 %v343, 1.442695
        %v345 = vpow.pop %v344
        %v346 = vsub.f32 %v330, %v342
        %v347 = vmul.f32 %v346, 1.442695
        %v348 = vpow.pop %v347
        %v349 = vadd.f32 %v345, %v348
        %v350 = vsub.f32 %v340, %v342
        %v351 = vmul.f32 %v350, 1.442695
        %v352 = vpow.pop %v351
        %v353 = vadd.f32 %v349, %v352
        %v354 = vlog2.pop %v353
        %v355 = vmul.f32 %v354, 0.6931472
        %v356 = vadd.f32 %v342, %v355
        %v357 = vld [vmem:[#allocation2] sm:$0xff]
        %v358 = vadd.f32 %v357, %v356
        %359 = vst [vmem:[#allocation2] sm:$0xff] %v358
        // Predicated region
        $region65: #{tpu_custom_call.1} parent=39 // pred_check
          %p360 = pneg %p305
        $region66: #{tpu_custom_call.1} parent=39 // pred_check_branch
          %362 = sbr.rel (%p360) target = $region68
        $region67: #{tpu_custom_call.1} parent=39 // pred_region
          %v363 = vld [vmem:[#allocation2] sm:$0xff]
          %364 = vadd.xlane.f32.xlu0 %v363
          %v365 = vpop.xlane.xlu0 %364
          %v366 = vrot.slane %v365, 4
          %v367 = vadd.f32 %v365, %v366
          %v368 = vrot.slane %v367, 2
          %v369 = vadd.f32 %v367, %v368
          %v370 = vrot.slane %v369, 1
          %v371 = vadd.f32 %v369, %v370
          %s372 = vtos %v371
          %s373 = sld [smem:[#allocation11 + %s29]]
          %s374 = sadd.f32 %s373, %s372
          %s375 = ssub.f32 %s374, 1124.979
          %v376 = vstv %s375
          %377 = vst [vmem:[%s304] sm:$0xff] %v376
        $region68: #{tpu_custom_call.1} parent=39 // pred_fallthru
          _
        %s378 = sand.u32 %s157, 1
        %s379 = scalar_lea.sflag [#allocation5], %s378
        %s380 = sand.u32 %s157, 1
        %s381 = smul.addr %s380, 8
        %s382 = scalar_lea.vmem [#allocation13], %s381
        // Predicated region
        $region69: #{tpu_custom_call.1} parent=39 // pred_check
          %p383 = pneg %p167
        $region70: #{tpu_custom_call.1} parent=39 // pred_check_branch
          %385 = sbr.rel (%p383) target = $region72
        $region71: #{tpu_custom_call.1} parent=39 // pred_region
          %s387 = ssub.s32 128, 128
          %388 = vsyncadd %s379, %s387
          %s389 = smul.addr %s29, 128
          %s390 = scalar_lea.hbm %s5, %s389
          %s392 = sshll.u32 %s382, 4
          %s393 = int_to_ptr.vmem [resolvable:$true] %s392
          %395 = dma.vmem_to_hbm [thread:$0]  %s393, 128, %s390, %s379
        $region72: #{tpu_custom_call.1} parent=39 // pred_fallthru
          _
      $region40: #{tpu_custom_call.1} parent=5 // pred_fallthru
        _
      %p396 = scmp.le.s32.totalorder 2, %s20
      // Predicated region
      $region73: #{tpu_custom_call.1} parent=5 // pred_check
        %p397 = pneg %p396
      $region74: #{tpu_custom_call.1} parent=5 // pred_check_branch
        %399 = sbr.rel (%p397) target = $region76
      $region75: #{tpu_custom_call.1} parent=5 // pred_region
        %s400 = ssub.s32 %s20, 2
        // Predicated region
        $region77: #{tpu_custom_call.1} parent=75 // pred_check
          %p401 = pneg %p173
        $region78: #{tpu_custom_call.1} parent=75 // pred_check_branch
          %403 = sbr.rel (%p401) target = $region80
        $region79: #{tpu_custom_call.1} parent=75 // pred_region
          %s404 = sand.u32 %s158, 1
          %s405 = scalar_lea.sflag [#allocation5], %s404
          %s406 = sand.u32 %s158, 1
          %s407 = smul.addr %s406, 8
          %s408 = scalar_lea.vmem [#allocation13], %s407
          %409 = dma.done %s405, 128
        $region80: #{tpu_custom_call.1} parent=75 // pred_fallthru
          _
      $region76: #{tpu_custom_call.1} parent=5 // pred_fallthru
        _
    $region6: #{tpu_custom_call.1} parent=1 // loop_footer
      %s24 = sadd.s32 1, %s20
    $region7: #{tpu_custom_call.1} parent=1 // loop_footer_branch
      %19 = sbr.rel target = $region3
    $region8: #{tpu_custom_call.1} parent=1 // loop_exit
      _
    %410 = vsyncpa [#allocation4], 1
    %s411 = scalar_lea.sflag [#allocation4], 1
    %412 = vsyncpa %s411, 1
    %413 = vsyncpa [#allocation5], 1
    %s414 = scalar_lea.sflag [#allocation5], 1
    %415 = vsyncpa %s414, 1
    %416 = vsyncpa [#allocation6], 1
    %s417 = scalar_lea.sflag [#allocation6], 1
    %418 = vsyncpa %s417, 1
    %419 = vsyncpa [#allocation7], 1
    %s420 = scalar_lea.sflag [#allocation7], 1
    %421 = vsyncpa %s420, 1
    %422 = vsyncpa [#allocation10], 1

</llo_original>
